<compile_context>
chip_gen: v7x
topology: tpu7x:2x2x1
jax: 0.10.0
libtpu: 0.0.40
codegen_flags: <defaults>
</compile_context>

<pallas_src>
import jax
import jax.numpy as jnp
import numpy as np
from jax.experimental import pallas as pl
from jax.experimental.pallas import tpu as pltpu

# ---------------- problem sizes (small, consistent with the module) ----------
B = 2          # batch
N = 4          # number of nodes / series
L = 16         # args.seq_len
H = 4          # c_in (channels per node)
D_MODEL = 32   # d_model
TAU = 2        # dilation
E = 3          # kernel size
L_OUT = L - TAU * (E - 1)   # n_manifold_embed = 12
EPS = 1e-6

_SQRT_HALF = float(1.0 / np.sqrt(2.0))


# ---------------- in-kernel exact GELU --------------------------------------
def _erf(x):
    # Abramowitz & Stegun 7.1.26 rational approximation (max abs err 1.5e-7),
    # built only from ops guaranteed to lower in Mosaic (exp, select, divide).
    # Error is far below the 1e-4 check tolerance of the exact erf-based GELU.
    # TODO(synk): switch to jax.lax.erf once its Mosaic lowering is guaranteed.
    a1, a2, a3, a4, a5 = (0.254829592, -0.284496736, 1.421413741,
                          -1.453152027, 1.061405429)
    p = 0.3275911
    sgn = jnp.where(x >= 0.0, 1.0, -1.0)
    ax = jnp.abs(x)
    t = 1.0 / (1.0 + p * ax)
    poly = ((((a5 * t + a4) * t + a3) * t + a2) * t + a1) * t
    return sgn * (1.0 - poly * jnp.exp(-ax * ax))


def _gelu_exact(x):
    return 0.5 * x * (1.0 + _erf(x * _SQRT_HALF))


# ---------------- fused kernel (single grid step) ----------------------------
def fused_kernel(x_ref, wz_ref, pb_ref, t_ref, out_ref, pmean_ref):
    # Folded conv + projection: one MXU matmul for all B*N series.
    z = jnp.dot(x_ref[...], wz_ref[...],
                preferred_element_type=jnp.float32)       # (B*N, D_MODEL)
    z = z + pb_ref[0]                                     # bias from SMEM
    g = _gelu_exact(z)                                    # (B*N, D_MODEL)

    p_sum = jnp.zeros((N, N), jnp.float32)
    for b in range(B):                                    # B=2: static unroll
        t = t_ref[b]                                      # (N, L)
        vx = t - jnp.mean(t, axis=-1, keepdims=True)
        num = jax.lax.dot_general(vx, vx, (((1,), (1,)), ((), ())),
                                  preferred_element_type=jnp.float32)  # (N, N)
        inv = 1.0 / jnp.sqrt(jnp.sum(vx * vx, axis=-1, keepdims=True) + EPS)
        p = num * inv * jnp.transpose(inv)                # (N, N)
        p_sum = p_sum + p
        out_ref[b * N:(b + 1) * N, :] = jnp.dot(
            p, g[b * N:(b + 1) * N, :], preferred_element_type=jnp.float32)

    pmean_ref[...] = p_sum * (1.0 / B)


def _fused_call(x_flat, wz, pb, target):
    return pl.pallas_call(
        fused_kernel,
        out_shape=(jax.ShapeDtypeStruct((B * N, D_MODEL), jnp.float32),
                   jax.ShapeDtypeStruct((N, N), jnp.float32)),
        grid=(1,),
        in_specs=[
            pl.BlockSpec((B * N, L * H), lambda i: (0, 0)),        # x (8, 64)
            pl.BlockSpec((L * H, D_MODEL), lambda i: (0, 0)),      # folded W
            pl.BlockSpec(memory_space=pltpu.MemorySpace.SMEM),     # bias scalar
            pl.BlockSpec((B, N, L), lambda i: (0, 0, 0)),          # target
        ],
        out_specs=(
            pl.BlockSpec((B * N, D_MODEL), lambda i: (0, 0)),
            pl.BlockSpec((N, N), lambda i: (0, 0)),
        ),
        compiler_params=pltpu.CompilerParams(
            dimension_semantics=("arbitrary",)),  # one step; do not shard TCs
    )(x_flat, wz, pb, target)


# ---------------- wrapper -----------------------------------------------------
def _fold_conv_proj_weights(conv_w, proj_w):
    """Fold dilated Conv1d weight (d_model, H, E) and Linear(L_OUT -> 1) weight
    (1, L_OUT) into a single (L*H, D_MODEL) matrix so the kernel only needs
        z[i, d] = sum_{l,h} x[i, l, h] * wz[l*H + h, d] + bias.
    Pure weight preprocessing (a few tiny XLA ops), no activation math here.
    """
    w_ehd = jnp.transpose(conv_w, (2, 1, 0)).astype(jnp.float32)   # (E, H, D)
    pw = proj_w.reshape(L_OUT).astype(jnp.float32)
    wz = jnp.zeros((L, H, D_MODEL), jnp.float32)
    for e in range(E):
        wz = wz.at[e * TAU:e * TAU + L_OUT].add(pw[:, None, None] * w_ehd[e][None])
    return wz.reshape(L * H, D_MODEL)


def manifold_embedding_forward(x, target, conv_w, proj_w, proj_b):
    """x: (B,N,L,H), target: (B,N,L).  Returns (conv_x (B,N,D), pearson (N,N))."""
    x_flat = x.reshape(B * N, L * H).astype(jnp.float32)   # lane-dense (8, 64)
    wz = _fold_conv_proj_weights(conv_w, proj_w)
    pb = proj_b.reshape(1).astype(jnp.float32)
    out_flat, pmean = _fused_call(x_flat, wz, pb, target.astype(jnp.float32))
    return out_flat.reshape(B, N, D_MODEL), pmean


# ---------------- pure-JAX reference (for correctness check) ------------------
def reference_forward(x, target, conv_w, proj_w, proj_b):
    inp = jnp.transpose(x.reshape(B * N, L, H), (0, 2, 1))          # (BN, H, L)
    conv_out = jnp.zeros((B * N, D_MODEL, L_OUT), jnp.float32)
    for e in range(E):
        conv_out = conv_out + jnp.einsum(
            'bhl,dh->bdl', inp[:, :, e * TAU:e * TAU + L_OUT], conv_w[:, :, e])
    vx = target - target.mean(axis=-1, keepdims=True)
    num = jnp.einsum('bnl,bml->bnm', vx, vx)
    ss = jnp.sqrt((vx * vx).sum(axis=-1, keepdims=True) + EPS)
    den = jnp.einsum('bni,bmi->bnm', ss, ss)
    p = num / den
    pmean = p.mean(axis=0)
    z = jnp.einsum('bdl,l->bd', conv_out, proj_w.reshape(L_OUT)) + proj_b[0]
    g = jax.nn.gelu(z, approximate=False).reshape(B, N, D_MODEL)
    out = jnp.einsum('bnm,bmd->bnd', p, g)
    return out, pmean


if __name__ == "__main__":
    key = jax.random.PRNGKey(0)
    k_x, k_t, k_w, k_pw, k_pb = jax.random.split(key, 5)

    x = jax.random.normal(k_x, (B, N, L, H), dtype=jnp.float32)
    target = jax.random.normal(k_t, (B, N, L), dtype=jnp.float32)

    # Conv1d weight (d_model, c_in, E), kaiming_normal-style (fan_in, leaky_relu)
    fan_in = H * E
    gain = np.sqrt(2.0 / (1.0 + 0.01 ** 2))
    conv_w = gain / np.sqrt(fan_in) * jax.random.normal(
        k_w, (D_MODEL, H, E), dtype=jnp.float32)
    # Linear(n_manifold_embed, 1): weight (1, L_out), bias (1,)
    bound = 1.0 / np.sqrt(L_OUT)
    proj_w = jax.random.uniform(k_pw, (1, L_OUT), minval=-bound, maxval=bound,
                                dtype=jnp.float32)
    proj_b = jax.random.uniform(k_pb, (1,), minval=-bound, maxval=bound,
                                dtype=jnp.float32)

    fwd = jax.jit(manifold_embedding_forward)
    out, pearson = fwd(x, target, conv_w, proj_w, proj_b)
    out = jax.block_until_ready(out)
    pearson = jax.block_until_ready(pearson)

    ref_out, ref_pearson = reference_forward(x, target, conv_w, proj_w, proj_b)
    np.testing.assert_allclose(np.asarray(out), np.asarray(ref_out),
                               rtol=1e-4, atol=1e-4)
    np.testing.assert_allclose(np.asarray(pearson), np.asarray(ref_pearson),
                               rtol=1e-4, atol=1e-4)

    print("KERNEL_OK")
</pallas_src>

<mosaic_0001>
module attributes {stable_mosaic.version = 11 : i64} {
  func.func @fused_kernel(%arg0: i32, %arg1: memref<8x64xf32, #tpu.memory_space<vmem>>, %arg2: memref<64x32xf32, #tpu.memory_space<vmem>>, %arg3: memref<1xf32, #tpu.memory_space<smem>>, %arg4: memref<2x4x16xf32, #tpu.memory_space<vmem>>, %arg5: memref<8x32xf32, #tpu.memory_space<vmem>>, %arg6: memref<4x4xf32, #tpu.memory_space<vmem>>) attributes {dimension_semantics = [#tpu.dimension_semantics<arbitrary>], iteration_bounds = array<i64: 1>, scalar_prefetch = 0 : i64, scratch_operands = 0 : i64, tpu.core_type = #tpu.core_type<tc>, window_params = [{pipeline_mode = #tpu.pipeline_mode<synchronous>, transform_indices = @transform_0, window_bounds = array<i64: 8, 64>}, {pipeline_mode = #tpu.pipeline_mode<synchronous>, transform_indices = @transform_1, window_bounds = array<i64: 64, 32>}, {transform_indices = @transform_2, window_bounds = array<i64: 1>}, {pipeline_mode = #tpu.pipeline_mode<synchronous>, transform_indices = @transform_3, window_bounds = array<i64: 2, 4, 16>}, {pipeline_mode = #tpu.pipeline_mode<synchronous>, transform_indices = @transform_4, window_bounds = array<i64: 8, 32>}, {pipeline_mode = #tpu.pipeline_mode<synchronous>, transform_indices = @transform_5, window_bounds = array<i64: 4, 4>}]} {
    %c0 = arith.constant 0 : index
    %c0_0 = arith.constant 0 : index
    %0 = vector.load %arg1[%c0, %c0_0] : memref<8x64xf32, #tpu.memory_space<vmem>>, vector<8x64xf32>
    %c0_1 = arith.constant 0 : index
    %c0_2 = arith.constant 0 : index
    %1 = vector.load %arg2[%c0_1, %c0_2] : memref<64x32xf32, #tpu.memory_space<vmem>>, vector<64x32xf32>
    %cst = arith.constant dense<0.000000e+00> : vector<8x32xf32>
    %2 = tpu.matmul %0, %1, %cst {dimension_numbers = #tpu.dot_dimension_numbers<[1], [0], [0], [1], [0, 0, 1, 1], [], []>} : vector<8x64xf32>, vector<64x32xf32>, vector<8x32xf32> -> vector<8x32xf32>
    %c0_3 = arith.constant 0 : index
    %3 = memref.load %arg3[%c0_3] : memref<1xf32, #tpu.memory_space<smem>>
    %4 = vector.broadcast %3 : f32 to vector<8x32xf32>
    %5 = arith.addf %2, %4 : vector<8x32xf32>
    %cst_4 = arith.constant 5.000000e-01 : f32
    %6 = vector.broadcast %cst_4 : f32 to vector<8x32xf32>
    %7 = arith.mulf %6, %5 : vector<8x32xf32>
    %cst_5 = arith.constant 0.707106769 : f32
    %8 = vector.broadcast %cst_5 : f32 to vector<8x32xf32>
    %9 = arith.mulf %5, %8 : vector<8x32xf32>
    %cst_6 = arith.constant 0.000000e+00 : f32
    %10 = vector.broadcast %cst_6 : f32 to vector<8x32xf32>
    %11 = arith.cmpf oge, %9, %10 : vector<8x32xf32>
    %cst_7 = arith.constant 1.000000e+00 : f32
    %cst_8 = arith.constant -1.000000e+00 : f32
    %12 = vector.broadcast %cst_7 : f32 to vector<8x32xf32>
    %13 = vector.broadcast %cst_8 : f32 to vector<8x32xf32>
    %14 = arith.select %11, %12, %13 : vector<8x32xi1>, vector<8x32xf32>
    %15 = math.absf %9 : vector<8x32xf32>
    %cst_9 = arith.constant 0.327591091 : f32
    %16 = vector.broadcast %cst_9 : f32 to vector<8x32xf32>
    %17 = arith.mulf %16, %15 : vector<8x32xf32>
    %cst_10 = arith.constant 1.000000e+00 : f32
    %18 = vector.broadcast %cst_10 : f32 to vector<8x32xf32>
    %19 = arith.addf %18, %17 : vector<8x32xf32>
    %cst_11 = arith.constant 1.000000e+00 : f32
    %20 = vector.broadcast %cst_11 : f32 to vector<8x32xf32>
    %21 = arith.divf %20, %19 : vector<8x32xf32>
    %cst_12 = arith.constant 1.06140542 : f32
    %22 = vector.broadcast %cst_12 : f32 to vector<8x32xf32>
    %23 = arith.mulf %22, %21 : vector<8x32xf32>
    %cst_13 = arith.constant -1.45315206 : f32
    %24 = vector.broadcast %cst_13 : f32 to vector<8x32xf32>
    %25 = arith.addf %23, %24 : vector<8x32xf32>
    %26 = arith.mulf %25, %21 : vector<8x32xf32>
    %cst_14 = arith.constant 1.42141378 : f32
    %27 = vector.broadcast %cst_14 : f32 to vector<8x32xf32>
    %28 = arith.addf %26, %27 : vector<8x32xf32>
    %29 = arith.mulf %28, %21 : vector<8x32xf32>
    %cst_15 = arith.constant -0.284496725 : f32
    %30 = vector.broadcast %cst_15 : f32 to vector<8x32xf32>
    %31 = arith.addf %29, %30 : vector<8x32xf32>
    %32 = arith.mulf %31, %21 : vector<8x32xf32>
    %cst_16 = arith.constant 0.254829586 : f32
    %33 = vector.broadcast %cst_16 : f32 to vector<8x32xf32>
    %34 = arith.addf %32, %33 : vector<8x32xf32>
    %35 = arith.mulf %34, %21 : vector<8x32xf32>
    %cst_17 = arith.constant 0.000000e+00 : f32
    %36 = vector.broadcast %cst_17 : f32 to vector<8x32xf32>
    %37 = arith.subf %36, %15 : vector<8x32xf32>
    %38 = arith.mulf %37, %15 : vector<8x32xf32>
    %39 = math.exp %38 : vector<8x32xf32>
    %40 = arith.mulf %35, %39 : vector<8x32xf32>
    %cst_18 = arith.constant 1.000000e+00 : f32
    %41 = vector.broadcast %cst_18 : f32 to vector<8x32xf32>
    %42 = arith.subf %41, %40 : vector<8x32xf32>
    %43 = arith.mulf %14, %42 : vector<8x32xf32>
    %cst_19 = arith.constant 1.000000e+00 : f32
    %44 = vector.broadcast %cst_19 : f32 to vector<8x32xf32>
    %45 = arith.addf %44, %43 : vector<8x32xf32>
    %46 = arith.mulf %7, %45 : vector<8x32xf32>
    %cst_20 = arith.constant 0.000000e+00 : f32
    %47 = vector.broadcast %cst_20 : f32 to vector<4x4xf32>
    %c0_21 = arith.constant 0 : index
    %c0_22 = arith.constant 0 : index
    %c0_23 = arith.constant 0 : index
    %48 = vector.load %arg4[%c0_21, %c0_22, %c0_23] : memref<2x4x16xf32, #tpu.memory_space<vmem>>, vector<1x4x16xf32>
    %49 = vector.shape_cast %48 : vector<1x4x16xf32> to vector<4x16xf32>
    %cst_24 = arith.constant dense<0.000000e+00> : vector<4xf32>
    %50 = vector.multi_reduction <add>, %49, %cst_24 [1] : vector<4x16xf32> to vector<4xf32>
    %51 = vector.shape_cast %50 : vector<4xf32> to vector<4x1xf32>
    %cst_25 = arith.constant 1.600000e+01 : f32
    %52 = vector.broadcast %cst_25 : f32 to vector<4x1xf32>
    %53 = arith.divf %51, %52 : vector<4x1xf32>
    %54 = vector.broadcast %53 : vector<4x1xf32> to vector<4x16xf32>
    %55 = arith.subf %49, %54 : vector<4x16xf32>
    %cst_26 = arith.constant dense<0.000000e+00> : vector<4x4xf32>
    %56 = tpu.matmul %55, %55, %cst_26 {dimension_numbers = #tpu.dot_dimension_numbers<[1], [1], [0], [0], [0, 0, 1, 0], [], []>} : vector<4x16xf32>, vector<4x16xf32>, vector<4x4xf32> -> vector<4x4xf32>
    %57 = arith.mulf %55, %55 : vector<4x16xf32>
    %cst_27 = arith.constant dense<0.000000e+00> : vector<4xf32>
    %58 = vector.multi_reduction <add>, %57, %cst_27 [1] : vector<4x16xf32> to vector<4xf32>
    %59 = vector.shape_cast %58 : vector<4xf32> to vector<4x1xf32>
    %cst_28 = arith.constant 9.99999997E-7 : f32
    %60 = vector.broadcast %cst_28 : f32 to vector<4x1xf32>
    %61 = arith.addf %59, %60 : vector<4x1xf32>
    %62 = math.sqrt %61 : vector<4x1xf32>
    %cst_29 = arith.constant 1.000000e+00 : f32
    %63 = vector.broadcast %cst_29 : f32 to vector<4x1xf32>
    %64 = arith.divf %63, %62 : vector<4x1xf32>
    %65 = vector.broadcast %64 : vector<4x1xf32> to vector<4x4xf32>
    %66 = arith.mulf %56, %65 : vector<4x4xf32>
    %67 = tpu.transpose %64, [1, 0] : vector<4x1xf32> -> vector<1x4xf32>
    %68 = vector.broadcast %67 : vector<1x4xf32> to vector<4x4xf32>
    %69 = arith.mulf %66, %68 : vector<4x4xf32>
    %70 = arith.addf %47, %69 : vector<4x4xf32>
    %71 = vector.extract_strided_slice %46 {offsets = [0, 0], sizes = [4, 32], strides = [1, 1]} : vector<8x32xf32> to vector<4x32xf32>
    %cst_30 = arith.constant dense<0.000000e+00> : vector<4x32xf32>
    %72 = tpu.matmul %69, %71, %cst_30 {dimension_numbers = #tpu.dot_dimension_numbers<[1], [0], [0], [1], [0, 0, 1, 1], [], []>} : vector<4x4xf32>, vector<4x32xf32>, vector<4x32xf32> -> vector<4x32xf32>
    %c0_31 = arith.constant 0 : index
    %c0_32 = arith.constant 0 : index
    %73 = vector.load %arg5[%c0_31, %c0_32] : memref<8x32xf32, #tpu.memory_space<vmem>>, vector<4x32xf32>
    tpu.vector_store %arg5[%c0_31, %c0_32], %72 {strides = array<i32>} : memref<8x32xf32, #tpu.memory_space<vmem>>, vector<4x32xf32>,
    %c1 = arith.constant 1 : index
    %c0_33 = arith.constant 0 : index
    %c0_34 = arith.constant 0 : index
    %74 = vector.load %arg4[%c1, %c0_33, %c0_34] : memref<2x4x16xf32, #tpu.memory_space<vmem>>, vector<1x4x16xf32>
    %75 = vector.shape_cast %74 : vector<1x4x16xf32> to vector<4x16xf32>
    %cst_35 = arith.constant dense<0.000000e+00> : vector<4xf32>
    %76 = vector.multi_reduction <add>, %75, %cst_35 [1] : vector<4x16xf32> to vector<4xf32>
    %77 = vector.shape_cast %76 : vector<4xf32> to vector<4x1xf32>
    %cst_36 = arith.constant 1.600000e+01 : f32
    %78 = vector.broadcast %cst_36 : f32 to vector<4x1xf32>
    %79 = arith.divf %77, %78 : vector<4x1xf32>
    %80 = vector.broadcast %79 : vector<4x1xf32> to vector<4x16xf32>
    %81 = arith.subf %75, %80 : vector<4x16xf32>
    %cst_37 = arith.constant dense<0.000000e+00> : vector<4x4xf32>
    %82 = tpu.matmul %81, %81, %cst_37 {dimension_numbers = #tpu.dot_dimension_numbers<[1], [1], [0], [0], [0, 0, 1, 0], [], []>} : vector<4x16xf32>, vector<4x16xf32>, vector<4x4xf32> -> vector<4x4xf32>
    %83 = arith.mulf %81, %81 : vector<4x16xf32>
    %cst_38 = arith.constant dense<0.000000e+00> : vector<4xf32>
    %84 = vector.multi_reduction <add>, %83, %cst_38 [1] : vector<4x16xf32> to vector<4xf32>
    %85 = vector.shape_cast %84 : vector<4xf32> to vector<4x1xf32>
    %cst_39 = arith.constant 9.99999997E-7 : f32
    %86 = vector.broadcast %cst_39 : f32 to vector<4x1xf32>
    %87 = arith.addf %85, %86 : vector<4x1xf32>
    %88 = math.sqrt %87 : vector<4x1xf32>
    %cst_40 = arith.constant 1.000000e+00 : f32
    %89 = vector.broadcast %cst_40 : f32 to vector<4x1xf32>
    %90 = arith.divf %89, %88 : vector<4x1xf32>
    %91 = vector.broadcast %90 : vector<4x1xf32> to vector<4x4xf32>
    %92 = arith.mulf %82, %91 : vector<4x4xf32>
    %93 = tpu.transpose %90, [1, 0] : vector<4x1xf32> -> vector<1x4xf32>
    %94 = vector.broadcast %93 : vector<1x4xf32> to vector<4x4xf32>
    %95 = arith.mulf %92, %94 : vector<4x4xf32>
    %96 = arith.addf %70, %95 : vector<4x4xf32>
    %97 = vector.extract_strided_slice %46 {offsets = [4, 0], sizes = [4, 32], strides = [1, 1]} : vector<8x32xf32> to vector<4x32xf32>
    %cst_41 = arith.constant dense<0.000000e+00> : vector<4x32xf32>
    %98 = tpu.matmul %95, %97, %cst_41 {dimension_numbers = #tpu.dot_dimension_numbers<[1], [0], [0], [1], [0, 0, 1, 1], [], []>} : vector<4x4xf32>, vector<4x32xf32>, vector<4x32xf32> -> vector<4x32xf32>
    %c4 = arith.constant 4 : index
    %c0_42 = arith.constant 0 : index
    %99 = vector.load %arg5[%c4, %c0_42] : memref<8x32xf32, #tpu.memory_space<vmem>>, vector<4x32xf32>
    tpu.vector_store %arg5[%c4, %c0_42], %98 {strides = array<i32>} : memref<8x32xf32, #tpu.memory_space<vmem>>, vector<4x32xf32>,
    %cst_43 = arith.constant 5.000000e-01 : f32
    %100 = vector.broadcast %cst_43 : f32 to vector<4x4xf32>
    %101 = arith.mulf %96, %100 : vector<4x4xf32>
    %c0_44 = arith.constant 0 : index
    %c0_45 = arith.constant 0 : index
    %102 = vector.load %arg6[%c0_44, %c0_45] : memref<4x4xf32, #tpu.memory_space<vmem>>, vector<4x4xf32>
    tpu.vector_store %arg6[%c0_44, %c0_45], %101 {strides = array<i32>} : memref<4x4xf32, #tpu.memory_space<vmem>>, vector<4x4xf32>,
    return
  }
  func.func @transform_0(%arg0: i32) -> (i32, i32) {
    %c0_i32 = arith.constant 0 : i32
    %c0_i32_0 = arith.constant 0 : i32
    %c0_i32_1 = arith.constant 0 : i32
    return %c0_i32, %c0_i32_0 : i32, i32
  }
  func.func @transform_1(%arg0: i32) -> (i32, i32) {
    %c0_i32 = arith.constant 0 : i32
    %c0_i32_0 = arith.constant 0 : i32
    %c0_i32_1 = arith.constant 0 : i32
    return %c0_i32, %c0_i32_0 : i32, i32
  }
  func.func @transform_2(%arg0: i32) -> i32 {
    %c0_i32 = arith.constant 0 : i32
    %c0_i32_0 = arith.constant 0 : i32
    return %c0_i32 : i32
  }
  func.func @transform_3(%arg0: i32) -> (i32, i32, i32) {
    %c0_i32 = arith.constant 0 : i32
    %c0_i32_0 = arith.constant 0 : i32
    %c0_i32_1 = arith.constant 0 : i32
    %c0_i32_2 = arith.constant 0 : i32
    return %c0_i32, %c0_i32_0, %c0_i32_1 : i32, i32, i32
  }
  func.func @transform_4(%arg0: i32) -> (i32, i32) {
    %c0_i32 = arith.constant 0 : i32
    %c0_i32_0 = arith.constant 0 : i32
    %c0_i32_1 = arith.constant 0 : i32
    return %c0_i32, %c0_i32_0 : i32, i32
  }
  func.func @transform_5(%arg0: i32) -> (i32, i32) {
    %c0_i32 = arith.constant 0 : i32
    %c0_i32_0 = arith.constant 0 : i32
    %c0_i32_1 = arith.constant 0 : i32
    return %c0_i32, %c0_i32_0 : i32, i32
  }
}

</mosaic_0001>

<llo_original>
// kernel: manifold_embedding_forward.1
$region0: #{manifold_embedding_forward.1}
  #allocation0 [shape = 'u32[]', space=smem, size = 0x4, offset = 0x4, fixed_abs, tag = 'smem constant byte address 0x4 - core index']
  #allocation1 [shape = 'u32[144,128]{1,0:T(1,128)}', space=vmem, size = 0x12000, scoped, tag = 'internal scratch']
  #allocation2 [shape = 'f32[1]{0:T(128)S(6)}', space=smem, size = 0x200, scoped, tag = 'scoped memory for manifold_embedding_forward.1']
  %s0 = inlined_call_operand.vmem [shape: f32[8,64], index: 0, kind: input, shape index: {}]
  %s1 = inlined_call_operand.vmem [shape: f32[64,32], index: 1, kind: input, shape index: {}]
  %s2 = inlined_call_operand.<no memory space> [shape: f32[1], index: 2, kind: input, shape index: {}]
  %s3 = inlined_call_operand.vmem [shape: f32[2,4,16], index: 3, kind: input, shape index: {}]
  %s4 = inlined_call_operand.hbm [shape: f32[8,32], index: 4, kind: output, shape index: {0}]
  %s5 = inlined_call_operand.hbm [shape: f32[4,4], index: 5, kind: output, shape index: {1}]
  %6 = xla_tuple %s4, %s5
  %s7 = sld [smem:[#allocation0]]
  $region34: #{manifold_embedding_forward.1} parent=0
    _
  %s9 = ssub.s32 1, %s7
  %s10 = scalar_select 0, %s9, %s7
  %11 = sst [smem:[#allocation2]] %s2
  $region1: #{manifold_embedding_forward.1} parent=0
    #allocation3 [shape = 'u8[4096]{0}', space=vmem, size = 0x1000, scoped, tag = 'output window, operand 0, single buffered']
    #allocation4 [shape = 's32[1]{0}', space=sflag, size = 0x4, scoped, tag = 'scoped memory for manifold_embedding_forward.1']
    #allocation5 [shape = 'u8[2048]{0}', space=vmem, size = 0x800, scoped, tag = 'output window, operand 1, single buffered']
    #allocation6 [shape = 's32[1]{0}', space=sflag, size = 0x4, scoped, tag = 'scoped memory for manifold_embedding_forward.1']
    %12 = vsyncpa [#allocation4], 0
    %13 = vsyncpa [#allocation6], 0
    // Predicated region
    $region2: #{manifold_embedding_forward.1} parent=1 // pred_check
      _
    $region3: #{manifold_embedding_forward.1} parent=1 // pred_check_branch
      %15 = sbr.rel (0) target = $region5
    $region4: #{manifold_embedding_forward.1} parent=1 // pred_region
      _
    $region5: #{manifold_embedding_forward.1} parent=1 // pred_fallthru
      _
    // Predicated region
    $region6: #{manifold_embedding_forward.1} parent=1 // pred_check
      _
    $region7: #{manifold_embedding_forward.1} parent=1 // pred_check_branch
      %17 = sbr.rel (0) target = $region9
    $region8: #{manifold_embedding_forward.1} parent=1 // pred_region
      _
    $region9: #{manifold_embedding_forward.1} parent=1 // pred_fallthru
      _
    // Predicated region
    $region10: #{manifold_embedding_forward.1} parent=1 // pred_check
      _
    $region11: #{manifold_embedding_forward.1} parent=1 // pred_check_branch
      %19 = sbr.rel (0) target = $region13
    $region12: #{manifold_embedding_forward.1} parent=1 // pred_region
      _
    $region13: #{manifold_embedding_forward.1} parent=1 // pred_fallthru
      _
    // Predicated region
    $region14: #{manifold_embedding_forward.1} parent=1 // pred_check
      _
    $region15: #{manifold_embedding_forward.1} parent=1 // pred_check_branch
      %21 = sbr.rel (0) target = $region17
    $region16: #{manifold_embedding_forward.1} parent=1 // pred_region
      _
    $region17: #{manifold_embedding_forward.1} parent=1 // pred_fallthru
      _
    %v22 = vld [vmem:[%s0] sm:$0xff]
    %v23 = vld [vmem:[%s1] sm:$0xff]
    %v24 = vld [vmem:[%s1 + $0x8] sm:$0xff]
    %v25 = vld [vmem:[%s1 + $0x10] sm:$0xff]
    %v26 = vld [vmem:[%s1 + $0x18] sm:$0xff]
    %v27 = vld [vmem:[%s1 + $0x20] sm:$0xff]
    %v28 = vld [vmem:[%s1 + $0x28] sm:$0xff]
    %v29 = vld [vmem:[%s1 + $0x30] sm:$0xff]
    %v30 = vld [vmem:[%s1 + $0x38] sm:$0xff]
    %s31 = sld [smem:[#allocation2]]
    %v32 = vstv %s31
    %vm33 = vcmask 523264
    %v35 = vsel %vm33, %v22, 0
    %37 = vmatprep.subr.mxu0 0.0
    %38 = vmatpush1.msra.mxu0 %v23
    %39 = vmatprep.subr.mxu0 0.0
    %40 = vmatpush1.msra.mxu0 %v24
    %41 = vmatprep.subr.mxu0 0.0
    %42 = vmatpush1.msra.mxu0 %v25
    %43 = vmatprep.subr.mxu0 0.0
    %44 = vmatpush1.msra.mxu0 %v26
    %45 = vmatprep.subr.mxu0 0.0
    %46 = vmatpush1.msra.mxu0 %v27
    %47 = vmatprep.subr.mxu0 0.0
    %48 = vmatpush1.msra.mxu0 %v28
    %49 = vmatprep.subr.mxu0 0.0
    %50 = vmatpush1.msra.mxu0 %v29
    %51 = vmatprep.subr.mxu0 0.0
    %52 = vmatpush1.msra.mxu0 %v30
    %53 = vmatprep.subr.mxu0 0.0
    %54 = vmatpush1.msra.mxu0 0.0
    %55 = vmatprep.subr.mxu0 0.0
    %56 = vmatpush1.msra.mxu0 0.0
    %57 = vmatprep.subr.mxu0 0.0
    %58 = vmatpush1.msra.mxu0 0.0
    %59 = vmatprep.subr.mxu0 0.0
    %60 = vmatpush1.msra.mxu0 0.0
    %61 = vmatprep.subr.mxu0 0.0
    %62 = vmatpush1.msra.mxu0 0.0
    %63 = vmatprep.subr.mxu0 0.0
    %64 = vmatpush1.msra.mxu0 0.0
    %65 = vmatprep.subr.mxu0 0.0
    %66 = vmatpush1.msra.mxu0 0.0
    %67 = vmatprep.subr.mxu0 0.0
    %68 = vmatpush1.msra.mxu0 0.0
    %69 = vmatprep.subr.mxu0 0.0
    %70 = vmatpush1.msra.mxu0 0.0
    %71 = vmatprep.subr.mxu0 0.0
    %72 = vmatpush1.msra.mxu0 0.0
    %73 = vmatprep.subr.mxu0 0.0
    %74 = vmatpush1.msra.mxu0 0.0
    %75 = vmatprep.subr.mxu0 0.0
    %76 = vmatpush1.msra.mxu0 0.0
    %77 = vmatprep.subr.mxu0 0.0
    %78 = vmatpush1.msra.mxu0 0.0
    %79 = vmatprep.subr.mxu0 0.0
    %80 = vmatpush1.msra.mxu0 0.0
    %81 = vmatprep.subr.mxu0 0.0
    %82 = vmatpush1.msra.mxu0 0.0
    %83 = vmatprep.subr.mxu0 0.0
    %84 = vmatpush1.msra.mxu0 0.0
    %85 = vmatprep.subr.mxu0 0.0
    %86 = vmatpush1.msra.mxu0 0.0
    %87 = vmatprep.subr.mxu0 0.0
    %88 = vmatpush1.msra.mxu0 0.0
    %89 = vmatprep.subr.mxu0 0.0
    %90 = vmatpush1.msra.mxu0 0.0
    %91 = vmatprep.subr.mxu0 0.0
    %92 = vmatpush1.msra.mxu0 0.0
    %93 = vmatprep.subr.mxu0 0.0
    %94 = vmatpush1.msra.mxu0 0.0
    %95 = vmatprep.subr.mxu0 0.0
    %96 = vmatpush1.msra.mxu0 0.0
    %97 = vmatprep.subr.mxu0 0.0
    %98 = vmatpush1.msra.mxu0 0.0
    %99 = vmatprep.subr.mxu0 0.0
    %100 = vmatpush1.msra.mxu0 0.0
    %101 = vmatprep.mubr.f32.mxu0 0.0
    %102 = vmatmul.mubr.f32.gmra.mrb[0].mxu0 %v35
    %v103 = vpop.f32.mrb[0].mxu0
    %v104 = vadd.f32 %v32, %v103
    %v105 = vpop.f32.mrb[0].mxu0
    %106 = vdwg.mxu0
    %v107 = vmul.f32 %v104, 0.5
    %v108 = vmul.f32 %v104, 0.70710677
    %vm109 = vcmp.ge.f32.partialorder %v108, 0.0
    %v110 = vsel %vm109, 1.0, -1.0
    %v111 = vand.u32 2147483647, %v108
    %v112 = vmul.f32 %v111, 0.3275911
    %v113 = vadd.f32 %v112, 1.0
    %v114 = vrcp.pop %v113
    %v115 = vmul.f32 1.0, %v114
    %v116 = vmul.f32 %v115, 1.0614054
    %v117 = vadd.f32 %v116, -1.4531521
    %v118 = vmul.f32 %v117, %v115
    %v119 = vadd.f32 %v118, 1.4214138
    %v120 = vmul.f32 %v119, %v115
    %v121 = vadd.f32 %v120, -0.28449672
    %v122 = vmul.f32 %v121, %v115
    %v123 = vadd.f32 %v122, 0.2548296
    %v124 = vmul.f32 %v123, %v115
    %v125 = vsub.f32 0.0, %v111
    %v126 = vmul.f32 %v125, %v111
    %v127 = vmul.f32 %v126, 1.442695
    %v128 = vpow.pop %v127
    %v129 = vmul.f32 %v124, %v128
    %v130 = vsub.f32 1.0, %v129
    %v131 = vmul.f32 %v110, %v130
    %v132 = vadd.f32 %v131, 1.0
    %v133 = vmul.f32 %v107, %v132
    %v134 = vld [vmem:[%s3] sm:$0xf]
    %vm135 = vcmask 125952
    %v136 = vsel %vm135, %v134, 0.0
    %137 = vadd.xlane.f32.xlu0 %v136
    %v138 = vpop.xlane.xlu0 %137
    %v139 = vrcp.pop 16.0
    %v140 = vmul.f32 %v138, %v139
    %v141 = vsub.f32 %v134, %v140
    %vm142 = vcmask 130048
    %v144 = vsel %vm142, %v141, 0
    %146 = vmatprep.subr.mxu0 0.0
    %147 = vmatpush1.xpose.msra.mxu0 %v144
    %148 = vmatprep.subr.mxu0 0.0
    %149 = vmatpush1.xpose.msra.mxu0 0.0
    %150 = vmatprep.subr.mxu0 0.0
    %151 = vmatpush1.xpose.msra.mxu0 0.0
    %152 = vmatprep.subr.mxu0 0.0
    %153 = vmatpush1.xpose.msra.mxu0 0.0
    %154 = vmatprep.subr.mxu0 0.0
    %155 = vmatpush1.xpose.msra.mxu0 0.0
    %156 = vmatprep.subr.mxu0 0.0
    %157 = vmatpush1.xpose.msra.mxu0 0.0
    %158 = vmatprep.subr.mxu0 0.0
    %159 = vmatpush1.xpose.msra.mxu0 0.0
    %160 = vmatprep.subr.mxu0 0.0
    %161 = vmatpush1.xpose.msra.mxu0 0.0
    %162 = vmatprep.subr.mxu0 0.0
    %163 = vmatpush1.xpose.msra.mxu0 0.0
    %164 = vmatprep.subr.mxu0 0.0
    %165 = vmatpush1.xpose.msra.mxu0 0.0
    %166 = vmatprep.subr.mxu0 0.0
    %167 = vmatpush1.xpose.msra.mxu0 0.0
    %168 = vmatprep.subr.mxu0 0.0
    %169 = vmatpush1.xpose.msra.mxu0 0.0
    %170 = vmatprep.subr.mxu0 0.0
    %171 = vmatpush1.xpose.msra.mxu0 0.0
    %172 = vmatprep.subr.mxu0 0.0
    %173 = vmatpush1.xpose.msra.mxu0 0.0
    %174 = vmatprep.subr.mxu0 0.0
    %175 = vmatpush1.xpose.msra.mxu0 0.0
    %176 = vmatprep.subr.mxu0 0.0
    %177 = vmatpush1.xpose.msra.mxu0 0.0
    %178 = vmatprep.subr.mxu0 0.0
    %179 = vmatpush1.xpose.msra.mxu0 0.0
    %180 = vmatprep.subr.mxu0 0.0
    %181 = vmatpush1.xpose.msra.mxu0 0.0
    %182 = vmatprep.subr.mxu0 0.0
    %183 = vmatpush1.xpose.msra.mxu0 0.0
    %184 = vmatprep.subr.mxu0 0.0
    %185 = vmatpush1.xpose.msra.mxu0 0.0
    %186 = vmatprep.subr.mxu0 0.0
    %187 = vmatpush1.xpose.msra.mxu0 0.0
    %188 = vmatprep.subr.mxu0 0.0
    %189 = vmatpush1.xpose.msra.mxu0 0.0
    %190 = vmatprep.subr.mxu0 0.0
    %191 = vmatpush1.xpose.msra.mxu0 0.0
    %192 = vmatprep.subr.mxu0 0.0
    %193 = vmatpush1.xpose.msra.mxu0 0.0
    %194 = vmatprep.subr.mxu0 0.0
    %195 = vmatpush1.xpose.msra.mxu0 0.0
    %196 = vmatprep.subr.mxu0 0.0
    %197 = vmatpush1.xpose.msra.mxu0 0.0
    %198 = vmatprep.subr.mxu0 0.0
    %199 = vmatpush1.xpose.msra.mxu0 0.0
    %200 = vmatprep.subr.mxu0 0.0
    %201 = vmatpush1.xpose.msra.mxu0 0.0
    %202 = vmatprep.subr.mxu0 0.0
    %203 = vmatpush1.xpose.msra.mxu0 0.0
    %204 = vmatprep.subr.mxu0 0.0
    %205 = vmatpush1.xpose.msra.mxu0 0.0
    %206 = vmatprep.subr.mxu0 0.0
    %207 = vmatpush1.xpose.msra.mxu0 0.0
    %208 = vmatprep.subr.mxu0 0.0
    %209 = vmatpush1.xpose.msra.mxu0 0.0
    %210 = vmatprep.mubr.f32.mxu0 0.0
    %211 = vmatmul.mubr.f32.gmra.mrb[0].mxu0 %v144
    %v212 = vpop.f32.mrb[0].mxu0
    %v213 = vadd.f32 0.0, %v212
    %v214 = vpop.f32.mrb[0].mxu0
    %215 = vdwg.mxu0
    %v216 = vmul.f32 %v141, %v141
    %v217 = vsel %vm135, %v216, 0.0
    %218 = vadd.xlane.f32.xlu0 %v217
    %v219 = vpop.xlane.xlu0 %218
    %v220 = vadd.f32 %v219, 1e-06
    %v221 = vrsqrt.pop %v220
    %v222 = vmul.f32 %v220, %v221
    %vm223 = vcmp.eq.f32.partialorder %v220, inf
    %v224 = vsel %vm223, %v220, %v222
    %vm225 = vcmp.eq.f32.partialorder %v220, 0.0
    %v226 = vand.u32 %v220, 2147483648
    %v227 = vsel %vm225, %v226, %v224
    %v228 = vrcp.pop %v227
    %v229 = vmul.f32 1.0, %v228
    %v230 = vmul.f32 %v213, %v229
    %231 = vxpose.xlu0.b32.start [1/16] %v229, 128
    %232 = vxpose.xlu0.b32.cont [2/16] 0.0, 128
    %233 = vxpose.xlu0.b32.cont [3/16] 0.0, 128
    %234 = vxpose.xlu0.b32.cont [4/16] 0.0, 128
    %235 = vxpose.xlu0.b32.cont [5/16] 0.0, 128
    %236 = vxpose.xlu0.b32.cont [6/16] 0.0, 128
    %237 = vxpose.xlu0.b32.cont [7/16] 0.0, 128
    %238 = vxpose.xlu0.b32.cont [8/16] 0.0, 128
    %239 = vxpose.xlu0.b32.cont [9/16] 0.0, 128
    %240 = vxpose.xlu0.b32.cont [10/16] 0.0, 128
    %241 = vxpose.xlu0.b32.cont [11/16] 0.0, 128
    %242 = vxpose.xlu0.b32.cont [12/16] 0.0, 128
    %243 = vxpose.xlu0.b32.cont [13/16] 0.0, 128
    %244 = vxpose.xlu0.b32.cont [14/16] 0.0, 128
    %245 = vxpose.xlu0.b32.cont [15/16] 0.0, 128
    %246 = vxpose.xlu0.b32.end [16/16] 0.0, 128
    %v247 = vpop.trf.xlu0
    %v248 = vpop.trf.xlu0
    %v249 = vpop.trf.xlu0
    %v250 = vpop.trf.xlu0
    %v251 = vpop.trf.xlu0
    %v252 = vpop.trf.xlu0
    %v253 = vpop.trf.xlu0
    %v254 = vpop.trf.xlu0
    %v255 = vpop.trf.xlu0
    %v256 = vpop.trf.xlu0
    %v257 = vpop.trf.xlu0
    %v258 = vpop.trf.xlu0
    %v259 = vpop.trf.xlu0
    %v260 = vpop.trf.xlu0
    %v261 = vpop.trf.xlu0
    %v262 = vpop.trf.xlu0
    %v263 = vlaneseq
    %v264 = vshrl.u32 %v263, 7
    %v265 = vsub.s32 0, %v264
    %v266 = vrot.slane %v247, %v265
    %v267 = vmul.f32 %v230, %v266
    %v268 = vadd.f32 %v267, 0.0
    %vm269 = vcmask 31744
    %v271 = vsel %vm269, %v267, 0
    %vm273 = vcmask 1043456
    %v275 = vsel %vm273, %v133, 0
    %277 = vmatprep.subr.mxu0 0.0
    %278 = vmatpush1.msra.mxu0 %v275
    %279 = vmatprep.subr.mxu0 0.0
    %280 = vmatpush1.msra.mxu0 0.0
    %281 = vmatprep.subr.mxu0 0.0
    %282 = vmatpush1.msra.mxu0 0.0
    %283 = vmatprep.subr.mxu0 0.0
    %284 = vmatpush1.msra.mxu0 0.0
    %285 = vmatprep.subr.mxu0 0.0
    %286 = vmatpush1.msra.mxu0 0.0
    %287 = vmatprep.subr.mxu0 0.0
    %288 = vmatpush1.msra.mxu0 0.0
    %289 = vmatprep.subr.mxu0 0.0
    %290 = vmatpush1.msra.mxu0 0.0
    %291 = vmatprep.subr.mxu0 0.0
    %292 = vmatpush1.msra.mxu0 0.0
    %293 = vmatprep.subr.mxu0 0.0
    %294 = vmatpush1.msra.mxu0 0.0
    %295 = vmatprep.subr.mxu0 0.0
    %296 = vmatpush1.msra.mxu0 0.0
    %297 = vmatprep.subr.mxu0 0.0
    %298 = vmatpush1.msra.mxu0 0.0
    %299 = vmatprep.subr.mxu0 0.0
    %300 = vmatpush1.msra.mxu0 0.0
    %301 = vmatprep.subr.mxu0 0.0
    %302 = vmatpush1.msra.mxu0 0.0
    %303 = vmatprep.subr.mxu0 0.0
    %304 = vmatpush1.msra.mxu0 0.0
    %305 = vmatprep.subr.mxu0 0.0
    %306 = vmatpush1.msra.mxu0 0.0
    %307 = vmatprep.subr.mxu0 0.0
    %308 = vmatpush1.msra.mxu0 0.0
    %309 = vmatprep.subr.mxu0 0.0
    %310 = vmatpush1.msra.mxu0 0.0
    %311 = vmatprep.subr.mxu0 0.0
    %312 = vmatpush1.msra.mxu0 0.0
    %313 = vmatprep.subr.mxu0 0.0
    %314 = vmatpush1.msra.mxu0 0.0
    %315 = vmatprep.subr.mxu0 0.0
    %316 = vmatpush1.msra.mxu0 0.0
    %317 = vmatprep.subr.mxu0 0.0
    %318 = vmatpush1.msra.mxu0 0.0
    %319 = vmatprep.subr.mxu0 0.0
    %320 = vmatpush1.msra.mxu0 0.0
    %321 = vmatprep.subr.mxu0 0.0
    %322 = vmatpush1.msra.mxu0 0.0
    %323 = vmatprep.subr.mxu0 0.0
    %324 = vmatpush1.msra.mxu0 0.0
    %325 = vmatprep.subr.mxu0 0.0
    %326 = vmatpush1.msra.mxu0 0.0
    %327 = vmatprep.subr.mxu0 0.0
    %328 = vmatpush1.msra.mxu0 0.0
    %329 = vmatprep.subr.mxu0 0.0
    %330 = vmatpush1.msra.mxu0 0.0
    %331 = vmatprep.subr.mxu0 0.0
    %332 = vmatpush1.msra.mxu0 0.0
    %333 = vmatprep.subr.mxu0 0.0
    %334 = vmatpush1.msra.mxu0 0.0
    %335 = vmatprep.subr.mxu0 0.0
    %336 = vmatpush1.msra.mxu0 0.0
    %337 = vmatprep.subr.mxu0 0.0
    %338 = vmatpush1.msra.mxu0 0.0
    %339 = vmatprep.subr.mxu0 0.0
    %340 = vmatpush1.msra.mxu0 0.0
    %341 = vmatprep.mubr.f32.mxu0 0.0
    %342 = vmatmul.mubr.f32.gmra.mrb[0].mxu0 %v271
    %v343 = vpop.f32.mrb[0].mxu0
    %v344 = vadd.f32 0.0, %v343
    %v345 = vpop.f32.mrb[0].mxu0
    %346 = vdwg.mxu0
    %vm347 = vcmask 257024
    %348 = vst.msk [vmem:[#allocation3] sm:$0xf] %vm347, %v344
    %s349 = scalar_lea.vmem %s3, 4
    %v350 = vld [vmem:[%s349] sm:$0xf]
    %v351 = vsel %vm135, %v350, 0.0
    %352 = vadd.xlane.f32.xlu0 %v351
    %v353 = vpop.xlane.xlu0 %352
    %v354 = vmul.f32 %v353, %v139
    %v355 = vsub.f32 %v350, %v354
    %v357 = vsel %vm142, %v355, 0
    %359 = vmatprep.subr.mxu0 0.0
    %360 = vmatpush1.xpose.msra.mxu0 %v357
    %361 = vmatprep.subr.mxu0 0.0
    %362 = vmatpush1.xpose.msra.mxu0 0.0
    %363 = vmatprep.subr.mxu0 0.0
    %364 = vmatpush1.xpose.msra.mxu0 0.0
    %365 = vmatprep.subr.mxu0 0.0
    %366 = vmatpush1.xpose.msra.mxu0 0.0
    %367 = vmatprep.subr.mxu0 0.0
    %368 = vmatpush1.xpose.msra.mxu0 0.0
    %369 = vmatprep.subr.mxu0 0.0
    %370 = vmatpush1.xpose.msra.mxu0 0.0
    %371 = vmatprep.subr.mxu0 0.0
    %372 = vmatpush1.xpose.msra.mxu0 0.0
    %373 = vmatprep.subr.mxu0 0.0
    %374 = vmatpush1.xpose.msra.mxu0 0.0
    %375 = vmatprep.subr.mxu0 0.0
    %376 = vmatpush1.xpose.msra.mxu0 0.0
    %377 = vmatprep.subr.mxu0 0.0
    %378 = vmatpush1.xpose.msra.mxu0 0.0
    %379 = vmatprep.subr.mxu0 0.0
    %380 = vmatpush1.xpose.msra.mxu0 0.0
    %381 = vmatprep.subr.mxu0 0.0
    %382 = vmatpush1.xpose.msra.mxu0 0.0
    %383 = vmatprep.subr.mxu0 0.0
    %384 = vmatpush1.xpose.msra.mxu0 0.0
    %385 = vmatprep.subr.mxu0 0.0
    %386 = vmatpush1.xpose.msra.mxu0 0.0
    %387 = vmatprep.subr.mxu0 0.0
    %388 = vmatpush1.xpose.msra.mxu0 0.0
    %389 = vmatprep.subr.mxu0 0.0
    %390 = vmatpush1.xpose.msra.mxu0 0.0
    %391 = vmatprep.subr.mxu0 0.0
    %392 = vmatpush1.xpose.msra.mxu0 0.0
    %393 = vmatprep.subr.mxu0 0.0
    %394 = vmatpush1.xpose.msra.mxu0 0.0
    %395 = vmatprep.subr.mxu0 0.0
    %396 = vmatpush1.xpose.msra.mxu0 0.0
    %397 = vmatprep.subr.mxu0 0.0
    %398 = vmatpush1.xpose.msra.mxu0 0.0
    %399 = vmatprep.subr.mxu0 0.0
    %400 = vmatpush1.xpose.msra.mxu0 0.0
    %401 = vmatprep.subr.mxu0 0.0
    %402 = vmatpush1.xpose.msra.mxu0 0.0
    %403 = vmatprep.subr.mxu0 0.0
    %404 = vmatpush1.xpose.msra.mxu0 0.0
    %405 = vmatprep.subr.mxu0 0.0
    %406 = vmatpush1.xpose.msra.mxu0 0.0
    %407 = vmatprep.subr.mxu0 0.0
    %408 = vmatpush1.xpose.msra.mxu0 0.0
    %409 = vmatprep.subr.mxu0 0.0
    %410 = vmatpush1.xpose.msra.mxu0 0.0
    %411 = vmatprep.subr.mxu0 0.0
    %412 = vmatpush1.xpose.msra.mxu0 0.0
    %413 = vmatprep.subr.mxu0 0.0
    %414 = vmatpush1.xpose.msra.mxu0 0.0
    %415 = vmatprep.subr.mxu0 0.0
    %416 = vmatpush1.xpose.msra.mxu0 0.0
    %417 = vmatprep.subr.mxu0 0.0
    %418 = vmatpush1.xpose.msra.mxu0 0.0
    %419 = vmatprep.subr.mxu0 0.0
    %420 = vmatpush1.xpose.msra.mxu0 0.0
    %421 = vmatprep.subr.mxu0 0.0
    %422 = vmatpush1.xpose.msra.mxu0 0.0
    %423 = vmatprep.mubr.f32.mxu0 0.0
    %424 = vmatmul.mubr.f32.gmra.mrb[0].mxu0 %v357
    %v425 = vpop.f32.mrb[0].mxu0
    %v426 = vadd.f32 0.0, %v425
    %v427 = vpop.f32.mrb[0].mxu0
    %428 = vdwg.mxu0
    %v429 = vmul.f32 %v355, %v355
    %v430 = vsel %vm135, %v429, 0.0
    %431 = vadd.xlane.f32.xlu0 %v430
    %v432 = vpop.xlane.xlu0 %431
    %v433 = vadd.f32 %v432, 1e-06
    %v434 = vrsqrt.pop %v433
    %v435 = vmul.f32 %v433, %v434
    %vm436 = vcmp.eq.f32.partialorder %v433, inf
    %v437 = vsel %vm436, %v433, %v435
    %vm438 = vcmp.eq.f32.partialorder %v433, 0.0
    %v439 = vand.u32 %v433, 2147483648
    %v440 = vsel %vm438, %v439, %v437
    %v441 = vrcp.pop %v440
    %v442 = vmul.f32 1.0, %v441
    %v443 = vmul.f32 %v426, %v442
    %444 = vxpose.xlu0.b32.start [1/16] %v442, 128
    %445 = vxpose.xlu0.b32.cont [2/16] 0.0, 128
    %446 = vxpose.xlu0.b32.cont [3/16] 0.0, 128
    %447 = vxpose.xlu0.b32.cont [4/16] 0.0, 128
    %448 = vxpose.xlu0.b32.cont [5/16] 0.0, 128
    %449 = vxpose.xlu0.b32.cont [6/16] 0.0, 128
    %450 = vxpose.xlu0.b32.cont [7/16] 0.0, 128
    %451 = vxpose.xlu0.b32.cont [8/16] 0.0, 128
    %452 = vxpose.xlu0.b32.cont [9/16] 0.0, 128
    %453 = vxpose.xlu0.b32.cont [10/16] 0.0, 128
    %454 = vxpose.xlu0.b32.cont [11/16] 0.0, 128
    %455 = vxpose.xlu0.b32.cont [12/16] 0.0, 128
    %456 = vxpose.xlu0.b32.cont [13/16] 0.0, 128
    %457 = vxpose.xlu0.b32.cont [14/16] 0.0, 128
    %458 = vxpose.xlu0.b32.cont [15/16] 0.0, 128
    %459 = vxpose.xlu0.b32.end [16/16] 0.0, 128
    %v460 = vpop.trf.xlu0
    %v461 = vpop.trf.xlu0
    %v462 = vpop.trf.xlu0
    %v463 = vpop.trf.xlu0
    %v464 = vpop.trf.xlu0
    %v465 = vpop.trf.xlu0
    %v466 = vpop.trf.xlu0
    %v467 = vpop.trf.xlu0
    %v468 = vpop.trf.xlu0
    %v469 = vpop.trf.xlu0
    %v470 = vpop.trf.xlu0
    %v471 = vpop.trf.xlu0
    %v472 = vpop.trf.xlu0
    %v473 = vpop.trf.xlu0
    %v474 = vpop.trf.xlu0
    %v475 = vpop.trf.xlu0
    %v476 = vlaneseq
    %v477 = vshrl.u32 %v476, 7
    %v478 = vsub.s32 0, %v477
    %v479 = vrot.slane %v460, %v478
    %v480 = vmul.f32 %v443, %v479
    %v481 = vadd.f32 %v268, %v480
    %v482 = vrot.slane %v133, 4
    %v484 = vsel %vm269, %v480, 0
    %v486 = vsel %vm273, %v482, 0
    %488 = vmatprep.subr.mxu0 0.0
    %489 = vmatpush1.msra.mxu0 %v486
    %490 = vmatprep.subr.mxu0 0.0
    %491 = vmatpush1.msra.mxu0 0.0
    %492 = vmatprep.subr.mxu0 0.0
    %493 = vmatpush1.msra.mxu0 0.0
    %494 = vmatprep.subr.mxu0 0.0
    %495 = vmatpush1.msra.mxu0 0.0
    %496 = vmatprep.subr.mxu0 0.0
    %497 = vmatpush1.msra.mxu0 0.0
    %498 = vmatprep.subr.mxu0 0.0
    %499 = vmatpush1.msra.mxu0 0.0
    %500 = vmatprep.subr.mxu0 0.0
    %501 = vmatpush1.msra.mxu0 0.0
    %502 = vmatprep.subr.mxu0 0.0
    %503 = vmatpush1.msra.mxu0 0.0
    %504 = vmatprep.subr.mxu0 0.0
    %505 = vmatpush1.msra.mxu0 0.0
    %506 = vmatprep.subr.mxu0 0.0
    %507 = vmatpush1.msra.mxu0 0.0
    %508 = vmatprep.subr.mxu0 0.0
    %509 = vmatpush1.msra.mxu0 0.0
    %510 = vmatprep.subr.mxu0 0.0
    %511 = vmatpush1.msra.mxu0 0.0
    %512 = vmatprep.subr.mxu0 0.0
    %513 = vmatpush1.msra.mxu0 0.0
    %514 = vmatprep.subr.mxu0 0.0
    %515 = vmatpush1.msra.mxu0 0.0
    %516 = vmatprep.subr.mxu0 0.0
    %517 = vmatpush1.msra.mxu0 0.0
    %518 = vmatprep.subr.mxu0 0.0
    %519 = vmatpush1.msra.mxu0 0.0
    %520 = vmatprep.subr.mxu0 0.0
    %521 = vmatpush1.msra.mxu0 0.0
    %522 = vmatprep.subr.mxu0 0.0
    %523 = vmatpush1.msra.mxu0 0.0
    %524 = vmatprep.subr.mxu0 0.0
    %525 = vmatpush1.msra.mxu0 0.0
    %526 = vmatprep.subr.mxu0 0.0
    %527 = vmatpush1.msra.mxu0 0.0
    %528 = vmatprep.subr.mxu0 0.0
    %529 = vmatpush1.msra.mxu0 0.0
    %530 = vmatprep.subr.mxu0 0.0
    %531 = vmatpush1.msra.mxu0 0.0
    %532 = vmatprep.subr.mxu0 0.0
    %533 = vmatpush1.msra.mxu0 0.0
    %534 = vmatprep.subr.mxu0 0.0
    %535 = vmatpush1.msra.mxu0 0.0
    %536 = vmatprep.subr.mxu0 0.0
    %537 = vmatpush1.msra.mxu0 0.0
    %538 = vmatprep.subr.mxu0 0.0
    %539 = vmatpush1.msra.mxu0 0.0
    %540 = vmatprep.subr.mxu0 0.0
    %541 = vmatpush1.msra.mxu0 0.0
    %542 = vmatprep.subr.mxu0 0.0
    %543 = vmatpush1.msra.mxu0 0.0
    %544 = vmatprep.subr.mxu0 0.0
    %545 = vmatpush1.msra.mxu0 0.0
    %546 = vmatprep.subr.mxu0 0.0
    %547 = vmatpush1.msra.mxu0 0.0
    %548 = vmatprep.subr.mxu0 0.0
    %549 = vmatpush1.msra.mxu0 0.0
    %550 = vmatprep.subr.mxu0 0.0
    %551 = vmatpush1.msra.mxu0 0.0
    %552 = vmatprep.mubr.f32.mxu0 0.0
    %553 = vmatmul.mubr.f32.gmra.mrb[0].mxu0 %v484
    %v554 = vpop.f32.mrb[0].mxu0
    %v555 = vadd.f32 0.0, %v554
    %v556 = vpop.f32.mrb[0].mxu0
    %557 = vdwg.mxu0
    %558 = vst.msk [vmem:[#allocation3 + $0x4] sm:$0xf] %vm347, %v555
    %v559 = vmul.f32 %v481, 0.5
    %vm560 = vcmask 27648
    %561 = vst.msk [vmem:[#allocation5] sm:$0xf] %vm560, %v559
    // Predicated region
    $region18: #{manifold_embedding_forward.1} parent=1 // pred_check
      _
    $region19: #{manifold_embedding_forward.1} parent=1 // pred_check_branch
      %563 = sbr.rel (0) target = $region21
    $region20: #{manifold_embedding_forward.1} parent=1 // pred_region
      %s565 = ssub.s32 128, 128
      %566 = vsyncadd [#allocation4], %s565
      %s568 = sshll.u32 [#allocation3], 4
      %s569 = int_to_ptr.vmem [resolvable:$true] %s568
      %571 = dma.vmem_to_hbm [thread:$0]  %s569, 128, %s4, [#allocation4]
    $region21: #{manifold_embedding_forward.1} parent=1 // pred_fallthru
      _
    // Predicated region
    $region22: #{manifold_embedding_forward.1} parent=1 // pred_check
      _
    $region23: #{manifold_embedding_forward.1} parent=1 // pred_check_branch
      %573 = sbr.rel (0) target = $region25
    $region24: #{manifold_embedding_forward.1} parent=1 // pred_region
      %s575 = ssub.s32 64, 64
      %576 = vsyncadd [#allocation6], %s575
      %s578 = sshll.u32 [#allocation5], 4
      %s579 = int_to_ptr.vmem [resolvable:$true] %s578
      %581 = dma.vmem_to_hbm [thread:$0]  %s579, 64, %s5, [#allocation6]
    $region25: #{manifold_embedding_forward.1} parent=1 // pred_fallthru
      _
    // Predicated region
    $region26: #{manifold_embedding_forward.1} parent=1 // pred_check
      _
    $region27: #{manifold_embedding_forward.1} parent=1 // pred_check_branch
      %583 = sbr.rel (0) target = $region29
    $region28: #{manifold_embedding_forward.1} parent=1 // pred_region
      %584 = dma.done [#allocation4], 128
    $region29: #{manifold_embedding_forward.1} parent=1 // pred_fallthru
      _
    // Predicated region
    $region30: #{manifold_embedding_forward.1} parent=1 // pred_check
      _
    $region31: #{manifold_embedding_forward.1} parent=1 // pred_check_branch
      %586 = sbr.rel (0) target = $region33
    $region32: #{manifold_embedding_forward.1} parent=1 // pred_region
      %587 = dma.done [#allocation6], 64
    $region33: #{manifold_embedding_forward.1} parent=1 // pred_fallthru
      _
    %588 = vsyncpa [#allocation4], 1
    %589 = vsyncpa [#allocation6], 1

</llo_original>
